<compile_context>
chip_gen: v5e
topology: v5e:2x2
jax: 0.10.0
libtpu: 0.0.40
codegen_flags: <defaults>
</compile_context>

<pallas_src>
import functools

import jax
import jax.numpy as jnp
from jax.experimental import pallas as pl
from jax.experimental.pallas import tpu as pltpu


# ---------------------------------------------------------------------------
# Kernel 1: hoisted input projection  gx[d] = x @ W_ih[d] + b[d]
# One big MXU matmul per direction; M-tile decoupled from the recurrence tile.
# ---------------------------------------------------------------------------
def _proj_kernel(x_ref, w_ref, b_ref, g_ref):
    # x_ref: (rows, D)   w_ref: (D, 4H)   b_ref: (1, 4H)   g_ref: (rows, 4H)
    g = jnp.dot(x_ref[...], w_ref[...], preferred_element_type=jnp.float32)
    g_ref[...] = (g + b_ref[...].astype(jnp.float32)).astype(g_ref.dtype)


def _pick_rows(m, step, target=1024):
    """Largest multiple of `step` dividing `m`, a multiple of 8 and <= target.

    Falls back to the full array (always a legal block)."""
    best = m
    k = step
    while k <= min(m, target):
        if m % k == 0 and k % 8 == 0:
            best = k
        k += step
    return best


def _input_projection(x_flat, w_ih, bias, *, rows, out_dtype):
    """x_flat: [M, D]; w_ih: [2, D, 4H]; bias: [2, 1, 4H] -> gx: [2, M, 4H]."""
    M, D = x_flat.shape
    G = w_ih.shape[-1]
    mb = M // rows
    # TODO(synk): for large D (previous layer's 2H) also tile the K dimension.
    return pl.pallas_call(
        _proj_kernel,
        out_shape=jax.ShapeDtypeStruct((2, M, G), out_dtype),
        grid_spec=pltpu.PrefetchScalarGridSpec(
            num_scalar_prefetch=0,
            grid=(2, mb),
            in_specs=[
                pl.BlockSpec((rows, D), lambda d, m: (m, 0)),
                pl.BlockSpec((None, D, G), lambda d, m: (d, 0, 0)),
                pl.BlockSpec((None, 1, G), lambda d, m: (d, 0, 0)),
            ],
            out_specs=pl.BlockSpec((None, rows, G), lambda d, m: (d, m, 0)),
        ),
        compiler_params=pltpu.CompilerParams(
            dimension_semantics=("parallel", "parallel")),
    )(x_flat, w_ih, bias)


# ---------------------------------------------------------------------------
# Kernel 2: fused bidirectional recurrence.  Grid = (time blocks,), sequential.
# At grid step t the forward chain consumes gate block t (rows 0..tt-1) and the
# backward chain consumes gate block nb-1-t in reversed row order, so both
# directions advance one "chain step" per inner iteration and their two
# independent h @ W_hh chains interleave to hide per-step latency.
# ---------------------------------------------------------------------------
def _bilstm_kernel(gxf_ref, gxb_ref, whh_ref, lim_ref,
                   yf_ref, yb_ref, hN_ref, cN_ref,
                   hf_sc, cf_sc, hb_sc, cb_sc, *, tt, hidden):
    t = pl.program_id(0)
    nb = pl.num_programs(0)
    H = hidden

    @pl.when(t == 0)
    def _():
        hf_sc[...] = jnp.zeros_like(hf_sc)
        cf_sc[...] = jnp.zeros_like(cf_sc)
        hb_sc[...] = jnp.zeros_like(hb_sc)
        cb_sc[...] = jnp.zeros_like(cb_sc)

    whh_f = whh_ref[0]                 # (H, 4H) in the matmul (maybe bf16) dtype
    whh_b = whh_ref[1]
    mm_dt = whh_f.dtype
    lim_f = lim_ref[0]                 # (B, 1): forward valid  iff pos <  lim_f
    lim_b = lim_ref[1]                 # (B, 1): backward valid iff pos >= lim_b
    p0 = t * tt                        # chain position of in-block row 0

    def cell(g, c_prev):
        i = jax.nn.sigmoid(g[:, 0 * H:1 * H])
        f = jax.nn.sigmoid(g[:, 1 * H:2 * H])
        gg = jnp.tanh(g[:, 2 * H:3 * H])
        o = jax.nn.sigmoid(g[:, 3 * H:4 * H])
        c = f * c_prev + i * gg
        return o * jnp.tanh(c), c

    def step(s, carry):
        hf, cf, hb, cb = carry                                    # f32 (B, H)
        r = tt - 1 - s                 # reversed in-block row for the bwd chain
        # Only the two h-recurrence matmuls (+ gate nonlinearities) are on the
        # serial critical path; the x projection was hoisted into _proj_kernel,
        # and the two independent chains interleave in the MXU/EUP pipelines.
        gf = gxf_ref[s].astype(jnp.float32) + jnp.dot(
            hf.astype(mm_dt), whh_f, preferred_element_type=jnp.float32)
        gb = gxb_ref[r].astype(jnp.float32) + jnp.dot(
            hb.astype(mm_dt), whh_b, preferred_element_type=jnp.float32)
        hf_c, cf_c = cell(gf, cf)
        hb_c, cb_c = cell(gb, cb)
        # Packed-sequence masking: one compare per direction (cheap VPU op off
        # the MXU/EUP chain); invalid steps freeze the state and emit zeros.
        pos = p0 + s
        vf = pos < lim_f                                          # (B, 1)
        vb = pos >= lim_b
        yf_ref[s] = jnp.where(vf, hf_c, 0.0).astype(yf_ref.dtype)
        yb_ref[r] = jnp.where(vb, hb_c, 0.0).astype(yb_ref.dtype)
        hf = jnp.where(vf, hf_c, hf)
        cf = jnp.where(vf, cf_c, cf)
        hb = jnp.where(vb, hb_c, hb)
        cb = jnp.where(vb, cb_c, cb)
        return hf, cf, hb, cb

    # Register-resident carries across the (capped-)unrolled time block; the
    # VMEM scratch is only read/written at block boundaries.
    carry0 = (hf_sc[...], cf_sc[...], hb_sc[...], cb_sc[...])
    hf, cf, hb, cb = jax.lax.fori_loop(0, tt, step, carry0,
                                       unroll=min(tt, 8))
    hf_sc[...] = hf
    cf_sc[...] = cf
    hb_sc[...] = hb
    cb_sc[...] = cb

    @pl.when(t == nb - 1)              # gated final-state write only
    def _():
        hN_ref[0] = hf.astype(hN_ref.dtype)
        hN_ref[1] = hb.astype(hN_ref.dtype)
        cN_ref[0] = cf.astype(cN_ref.dtype)
        cN_ref[1] = cb.astype(cN_ref.dtype)


def _bilstm_recurrence(gx, w_hh, lim, *, tt, hidden, out_dtype):
    """gx: [2, T2p, B, 4H]; w_hh: [2, H, 4H]; lim: [2, B, 1] int32."""
    _, T2p, B, G = gx.shape
    nb = T2p // tt
    kernel = functools.partial(_bilstm_kernel, tt=tt, hidden=hidden)
    # NOTE (v7x): with two TensorCores per chip, an alternative layout keeps a
    # leading direction axis marked "parallel" (one direction per TC); the fused
    # body below is the right choice on the single-TC v5e/v6e and is competitive
    # on v7x at small batch since each chain alone is latency-bound.
    return pl.pallas_call(
        kernel,
        out_shape=(
            jax.ShapeDtypeStruct((T2p, B, hidden), out_dtype),    # y forward
            jax.ShapeDtypeStruct((T2p, B, hidden), out_dtype),    # y backward
            jax.ShapeDtypeStruct((2, B, hidden), jnp.float32),    # h_n
            jax.ShapeDtypeStruct((2, B, hidden), jnp.float32),    # c_n
        ),
        grid_spec=pltpu.PrefetchScalarGridSpec(
            num_scalar_prefetch=0,
            grid=(nb,),
            in_specs=[
                # forward gates: time block t; backward gates: time block nb-1-t
                # (in-kernel row reversal completes the time flip, so no XLA
                # flip/copy of gx is ever materialized).
                pl.BlockSpec((None, tt, B, G), lambda t: (0, t, 0, 0)),
                pl.BlockSpec((None, tt, B, G), lambda t: (1, nb - 1 - t, 0, 0)),
                pl.BlockSpec((2, hidden, G), lambda t: (0, 0, 0)),
                pl.BlockSpec((2, B, 1), lambda t: (0, 0, 0)),
            ],
            out_specs=(
                pl.BlockSpec((tt, B, hidden), lambda t: (t, 0, 0)),
                pl.BlockSpec((tt, B, hidden), lambda t: (nb - 1 - t, 0, 0)),
                pl.BlockSpec((2, B, hidden), lambda t: (0, 0, 0)),
                pl.BlockSpec((2, B, hidden), lambda t: (0, 0, 0)),
            ),
            scratch_shapes=[
                pltpu.VMEM((B, hidden), jnp.float32),   # h fwd carry
                pltpu.VMEM((B, hidden), jnp.float32),   # c fwd carry
                pltpu.VMEM((B, hidden), jnp.float32),   # h bwd carry
                pltpu.VMEM((B, hidden), jnp.float32),   # c bwd carry
            ],
        ),
        compiler_params=pltpu.CompilerParams(
            dimension_semantics=("arbitrary",)),
    )(gx, gx, w_hh, lim)   # gx passed twice: one BlockSpec per direction


# ---------------------------------------------------------------------------
# Wrapper: full pBLSTM forward (batch_first padded input + lengths).
# ---------------------------------------------------------------------------
def pblstm_forward(x, lx, params, *, tt=8, gx_dtype=jnp.float32):
    """Eval-mode pBLSTM forward.

    x: [B, T, D] padded batch_first input; lx: [B] int lengths.
    params: (w_ih_f [D,4H], w_hh_f [H,4H], b_f [4H],
             w_ih_b [D,4H], w_hh_b [H,4H], b_b [4H]), with b = b_ih + b_hh.
    Returns (out [B, T//2, 2H] in x.dtype, (h_n [2,B,H], c_n [2,B,H]) f32, lx//2).
    """
    w_ih_f, w_hh_f, b_f, w_ih_b, w_hh_b, b_b = params
    B, T, D = x.shape
    H = w_hh_f.shape[0]
    G = 4 * H

    # --- 1. pyramidal time reduction (drop odd tail, max over adjacent pairs)
    # done on the batch-major array FIRST, so only the halved tensor is then
    # transposed to time-major and padded (the full-size transpose is gone).
    T_even = (T // 2) * 2
    T2 = T_even // 2
    lx2 = (lx // 2).astype(jnp.int32)
    nb = -(-T2 // tt)
    T2p = nb * tt
    x_red = jnp.max(x[:, :T_even, :].reshape(B, T2, 2, D), axis=2)   # [B, T2, D]
    x_tm = jnp.transpose(x_red, (1, 0, 2))                           # [T2, B, D]
    if T2p != T2:
        # padded steps are masked out inside the recurrent kernel.
        x_tm = jnp.pad(x_tm, ((0, T2p - T2), (0, 0), (0, 0)))
    # TODO(synk): the pairwise max / transpose could be fused into the
    # projection kernel entirely (read raw x blocks, max+relayout in-kernel).

    # --- 2. hoisted input projection, both directions in one pallas_call.
    w_ih = jnp.stack([w_ih_f, w_ih_b], axis=0)                       # [2, D, 4H]
    bias = jnp.stack([b_f, b_b], axis=0)[:, None, :]                 # [2, 1, 4H]
    M = T2p * B
    rows = _pick_rows(M, tt * B)                                     # big M-tile
    gx = _input_projection(x_tm.reshape(M, D), w_ih, bias,
                           rows=rows, out_dtype=gx_dtype)
    gx = gx.reshape(2, T2p, B, G)

    # Backward valid window in chain coordinates (chain pos p -> true time
    # T2p-1-p): valid iff p >= T2p - lx2.  Forward: valid iff p < lx2.
    lim = jnp.stack([lx2, T2p - lx2], axis=0)[:, :, None].astype(jnp.int32)
    w_hh = jnp.stack([w_hh_f, w_hh_b], axis=0)                       # [2, H, 4H]

    # --- 3. fused bidirectional recurrence (single Pallas kernel).
    y_f, y_b, h_n, c_n = _bilstm_recurrence(gx, w_hh, lim, tt=tt, hidden=H,
                                            out_dtype=x.dtype)

    # y_f / y_b are already in true time order; only concat + batch-first
    # transpose remain in XLA.
    out = jnp.transpose(jnp.concatenate([y_f[:T2], y_b[:T2]], axis=-1),
                        (1, 0, 2))

    # TODO(synk): LockedDropout(p=0.2) is a training-time stochastic op; the
    # eval-mode forward is the identity, so it is omitted here.
    # TODO(synk): PackedSequence (re)packing has no Pallas equivalent; the
    # padded output (positions >= lx//2 zeroed, matching pad_packed_sequence)
    # plus the halved lengths are returned for both last_layer and
    # intermediate-layer use.
    return out, (h_n, c_n), lx2


# ---------------------------------------------------------------------------
# Pure-JAX reference (lax.scan) mirroring the PyTorch pBLSTM forward.
# ---------------------------------------------------------------------------
def _pblstm_reference(x, lx, params):
    w_ih_f, w_hh_f, b_f, w_ih_b, w_hh_b, b_b = params
    B, T, D = x.shape
    H = w_hh_f.shape[0]
    T_even = (T // 2) * 2
    T2 = T_even // 2
    lx2 = (lx // 2).astype(jnp.int32)
    xr = jnp.max(x[:, :T_even, :].reshape(B, T2, 2, D), axis=2)      # [B, T2, D]
    x_tm = jnp.transpose(xr, (1, 0, 2)).astype(jnp.float32)          # [T2, B, D]

    def run_dir(w_ih, w_hh, b, reverse):
        def step(carry, inp):
            h_prev, c_prev = carry
            x_t, t = inp
            g = x_t @ w_ih + h_prev @ w_hh + b
            i = jax.nn.sigmoid(g[:, 0:H])
            f = jax.nn.sigmoid(g[:, H:2 * H])
            gg = jnp.tanh(g[:, 2 * H:3 * H])
            o = jax.nn.sigmoid(g[:, 3 * H:4 * H])
            c_c = f * c_prev + i * gg
            h_c = o * jnp.tanh(c_c)
            valid = (t < lx2)[:, None]
            h = jnp.where(valid, h_c, h_prev)
            c = jnp.where(valid, c_c, c_prev)
            return (h, c), jnp.where(valid, h_c, 0.0)

        ts = jnp.arange(T2, dtype=jnp.int32)
        xs = (x_tm[::-1], ts[::-1]) if reverse else (x_tm, ts)
        init = (jnp.zeros((B, H), jnp.float32), jnp.zeros((B, H), jnp.float32))
        (hT, cT), ys = jax.lax.scan(step, init, xs)
        if reverse:
            ys = ys[::-1]
        return ys, hT, cT

    y_f, h_f, c_f = run_dir(w_ih_f, w_hh_f, b_f, False)
    y_b, h_b, c_b = run_dir(w_ih_b, w_hh_b, b_b, True)
    out = jnp.transpose(jnp.concatenate([y_f, y_b], axis=-1), (1, 0, 2))
    return out, (jnp.stack([h_f, h_b]), jnp.stack([c_f, c_b])), lx2


if __name__ == "__main__":
    B, T, D, H = 2, 32, 16, 32      # batch, seq, input_size, hidden_size
    key = jax.random.PRNGKey(0)
    kx, kp = jax.random.split(key)
    x = jax.random.normal(kx, (B, T, D), dtype=jnp.float32)
    lx = jnp.array([T, 27], dtype=jnp.int32)   # variable lengths (packed-seq semantics)

    bound = 1.0 / float(H) ** 0.5

    def init_direction(k):
        k1, k2, k3, k4 = jax.random.split(k, 4)
        w_ih = jax.random.uniform(k1, (D, 4 * H), minval=-bound, maxval=bound,
                                  dtype=jnp.float32)
        w_hh = jax.random.uniform(k2, (H, 4 * H), minval=-bound, maxval=bound,
                                  dtype=jnp.float32)
        b_ih = jax.random.uniform(k3, (4 * H,), minval=-bound, maxval=bound,
                                  dtype=jnp.float32)
        b_hh = jax.random.uniform(k4, (4 * H,), minval=-bound, maxval=bound,
                                  dtype=jnp.float32)
        return w_ih, w_hh, b_ih + b_hh

    kf, kb = jax.random.split(kp)
    params = init_direction(kf) + init_direction(kb)

    out, (h_n, c_n), lx2 = pblstm_forward(x, lx, params, tt=8)
    jax.block_until_ready((out, h_n, c_n))

    out_ref, (h_ref, c_ref), lx2_ref = _pblstm_reference(x, lx, params)
    T2 = T // 2
    assert out.shape == (B, T2, 2 * H)
    assert h_n.shape == (2, B, H) and c_n.shape == (2, B, H)
    assert bool(jnp.array_equal(lx2, lx2_ref))
    assert jnp.allclose(out, out_ref, atol=2e-5, rtol=2e-5)
    assert jnp.allclose(h_n, h_ref, atol=2e-5, rtol=2e-5)
    assert jnp.allclose(c_n, c_ref, atol=2e-5, rtol=2e-5)

    # bf16 MXU path (weights/activations in bf16; f32 accumulate; gx, h/c carry
    # and the gate math stay f32 inside the kernels; y emitted in bf16).
    params_bf16 = tuple(p.astype(jnp.bfloat16) for p in params)
    out_bf, (h_bf, _), _ = pblstm_forward(x.astype(jnp.bfloat16), lx,
                                          params_bf16, tt=8)
    jax.block_until_ready((out_bf, h_bf))
    assert jnp.allclose(out_bf.astype(jnp.float32), out_ref, atol=5e-2, rtol=5e-2)

    print("KERNEL_OK")
</pallas_src>

<mosaic_0001>
module attributes {stable_mosaic.version = 11 : i64} {
  func.func @_proj_kernel(%arg0: i32, %arg1: i32, %arg2: memref<32x16xf32, #tpu.memory_space<vmem>>, %arg3: memref<1x16x128xf32, #tpu.memory_space<vmem>>, %arg4: memref<1x1x128xf32, #tpu.memory_space<vmem>>, %arg5: memref<1x32x128xf32, #tpu.memory_space<vmem>>) attributes {dimension_semantics = [#tpu.dimension_semantics<parallel>, #tpu.dimension_semantics<parallel>], iteration_bounds = array<i64: 2, 1>, scalar_prefetch = 0 : i64, scratch_operands = 0 : i64, tpu.core_type = #tpu.core_type<tc>, window_params = [{transform_indices = @transform_0, window_bounds = array<i64: 32, 16>}, {transform_indices = @transform_1, window_bounds = array<i64: 1, 16, 128>}, {transform_indices = @transform_2, window_bounds = array<i64: 1, 1, 128>}, {transform_indices = @transform_3, window_bounds = array<i64: 1, 32, 128>}]} {
    %c0 = arith.constant 0 : index
    %c0_0 = arith.constant 0 : index
    %0 = vector.load %arg2[%c0, %c0_0] : memref<32x16xf32, #tpu.memory_space<vmem>>, vector<32x16xf32>
    %c0_1 = arith.constant 0 : index
    %c0_2 = arith.constant 0 : index
    %c0_3 = arith.constant 0 : index
    %1 = vector.load %arg3[%c0_1, %c0_2, %c0_3] : memref<1x16x128xf32, #tpu.memory_space<vmem>>, vector<1x16x128xf32>
    %2 = vector.shape_cast %1 : vector<1x16x128xf32> to vector<16x128xf32>
    %cst = arith.constant dense<0.000000e+00> : vector<32x128xf32>
    %3 = tpu.matmul %0, %2, %cst {dimension_numbers = #tpu.dot_dimension_numbers<[1], [0], [0], [1], [0, 0, 1, 1], [], []>} : vector<32x16xf32>, vector<16x128xf32>, vector<32x128xf32> -> vector<32x128xf32>
    %c0_4 = arith.constant 0 : index
    %c0_5 = arith.constant 0 : index
    %c0_6 = arith.constant 0 : index
    %4 = vector.load %arg4[%c0_4, %c0_5, %c0_6] : memref<1x1x128xf32, #tpu.memory_space<vmem>>, vector<1x1x128xf32>
    %5 = vector.shape_cast %4 : vector<1x1x128xf32> to vector<1x128xf32>
    %6 = vector.broadcast %5 : vector<1x128xf32> to vector<32x128xf32>
    %7 = arith.addf %3, %6 : vector<32x128xf32>
    %c0_7 = arith.constant 0 : index
    %c0_8 = arith.constant 0 : index
    %c0_9 = arith.constant 0 : index
    %8 = vector.load %arg5[%c0_7, %c0_8, %c0_9] : memref<1x32x128xf32, #tpu.memory_space<vmem>>, vector<1x32x128xf32>
    %9 = vector.shape_cast %8 : vector<1x32x128xf32> to vector<32x128xf32>
    %10 = vector.shape_cast %7 : vector<32x128xf32> to vector<1x32x128xf32>
    tpu.vector_store %arg5[%c0_7, %c0_8, %c0_9], %10 {strides = array<i32>} : memref<1x32x128xf32, #tpu.memory_space<vmem>>, vector<1x32x128xf32>,
    return
  }
  func.func @transform_0(%arg0: i32, %arg1: i32) -> (i32, i32) {
    %c0_i32 = arith.constant 0 : i32
    %c0_i32_0 = arith.constant 0 : i32
    return %arg1, %c0_i32 : i32, i32
  }
  func.func @transform_1(%arg0: i32, %arg1: i32) -> (i32, i32, i32) {
    %c0_i32 = arith.constant 0 : i32
    %c0_i32_0 = arith.constant 0 : i32
    %c0_i32_1 = arith.constant 0 : i32
    return %arg0, %c0_i32, %c0_i32_0 : i32, i32, i32
  }
  func.func @transform_2(%arg0: i32, %arg1: i32) -> (i32, i32, i32) {
    %c0_i32 = arith.constant 0 : i32
    %c0_i32_0 = arith.constant 0 : i32
    %c0_i32_1 = arith.constant 0 : i32
    return %arg0, %c0_i32, %c0_i32_0 : i32, i32, i32
  }
  func.func @transform_3(%arg0: i32, %arg1: i32) -> (i32, i32, i32) {
    %c0_i32 = arith.constant 0 : i32
    %c0_i32_0 = arith.constant 0 : i32
    return %arg0, %arg1, %c0_i32 : i32, i32, i32
  }
}

</mosaic_0001>

<llo_original>
// kernel: tpu_custom_call.1
$region0: #{tpu_custom_call.1}
  #allocation0 [shape = 'u32[]', space=smem, size = 0x4, offset = 0x4, fixed_abs, tag = 'smem constant byte address 0x4 - core index']
  #allocation1 [shape = 'u32[72,128]{1,0:T(1,128)}', space=vmem, size = 0x9000, scoped, tag = 'internal scratch']
  %s0 = inlined_call_operand.vmem [shape: f32[32,16], index: 0, kind: input, shape index: {}]
  %s1 = inlined_call_operand.vmem [shape: f32[2,16,128], index: 1, kind: input, shape index: {}]
  %s2 = inlined_call_operand.vmem [shape: f32[2,1,128], index: 2, kind: input, shape index: {}]
  %s3 = inlined_call_operand.hbm [shape: f32[2,32,128], index: 3, kind: output, shape index: {}]
  %s4 = sld [smem:[#allocation0]]
  $region45: #{tpu_custom_call.1} parent=0
    _
  %s6 = ssub.s32 1, %s4
  %s7 = scalar_select 0, %s6, %s4
  $region1: #{tpu_custom_call.1} parent=0
    #allocation2 [shape = 'u8[32768]{0}', space=vmem, size = 0x8000, scoped, tag = 'output window, operand 0']
    #allocation3 [shape = 's32[2]{0}', space=sflag, size = 0x8, scoped, tag = 'scoped memory for tpu_custom_call.1']
    %8 = vsyncpa [#allocation3], 0
    %s9 = scalar_lea.sflag [#allocation3], 1
    %10 = vsyncpa %s9, 0
    loop: start=0, step=1, limit=4
    $region2: #{tpu_custom_call.1} parent=1 // loop_pre_header
      _
    $region3: #{tpu_custom_call.1} parent=1 // loop_header
      %s12 = sphi 0, %s16
      %p13 = scmp.ge.s32.totalorder %s12, 4
      %s19 = sphi 0, %s31
      %s20 = sphi 0, %s27
      %s21 = sphi 0, %s19
      %s22 = sphi 0, %s20
      %s23 = sphi 0, %s21
      %s24 = sphi 0, %s22
      %s34 = sphi 0, %s36
      %s37 = sphi 0, %s34
      %s38 = sphi 0, %s37
      %s54 = sphi 0, %s38
      %s60 = sphi 0, %s62
      %s63 = sphi 0, %s60
      %s64 = sphi 0, %s63
      %s80 = sphi 0, %s64
      %s86 = sphi 0, %s88
      %s89 = sphi 0, %s86
      %s90 = sphi 0, %s89
      %s106 = sphi 0, %s90
      %s114 = sphi 0, %s116
      %s117 = sphi 0, %s114
      %s118 = sphi 0, %s117
      %s134 = sphi 0, %s118
    $region4: #{tpu_custom_call.1} parent=1 // loop_header_branch
      %15 = sbr.rel (%p13) target = $region8
    $region5: #{tpu_custom_call.1} parent=1 // loop_body
      %s17 = ssub.s32 %s12, 1
      %s18 = ssub.s32 %s12, 2
      %s25 = sadd.s32 1, %s20
      %p26 = scmp.ge.s32.totalorder %s25, 1
      %s27 = scalar_select %p26, 0, %s25
      %s28 = sadd.s32 1, %s19
      %s29 = scalar_select %p26, %s28, %s19
      %p30 = scmp.ge.s32.totalorder %s29, 2
      %s31 = scalar_select %p30, 0, %s29
      %s32 = ssub.s32 %s20, %s27
      %p33 = scmp.eq.s32.totalorder %s32, 0
      %s35 = sadd.s32 %s34, 1
      %s36 = scalar_select %p33, %s34, %s35
      %p39 = pneg %p33
      %p40 = scmp.eq.s32.totalorder %s12, 1
      %p41 = por %p39, %p40
      %p42 = scmp.ne.s32.totalorder %s34, %s37
      %p43 = scmp.eq.s32.totalorder %s12, 0
      %p44 = por %p42, %p43
      %p45 = scmp.ne.s32.totalorder %s34, %s37
      %p46 = scmp.eq.s32.totalorder %s17, 1
      %p47 = por %p45, %p46
      %p48 = scmp.ne.s32.totalorder %s37, %s38
      %p49 = scmp.eq.s32.totalorder %s17, 0
      %p50 = por %p48, %p49
      %p51 = scmp.ne.s32.totalorder %s37, %s38
      %p52 = scmp.eq.s32.totalorder %s18, 1
      %p53 = por %p51, %p52
      %p55 = scmp.ne.s32.totalorder %s38, %s54
      %p56 = scmp.eq.s32.totalorder %s18, 0
      %p57 = por %p55, %p56
      %s58 = ssub.s32 %s19, %s31
      %p59 = scmp.eq.s32.totalorder %s58, 0
      %s61 = sadd.s32 %s60, 1
      %s62 = scalar_select %p59, %s60, %s61
      %p65 = pneg %p59
      %p66 = scmp.eq.s32.totalorder %s12, 1
      %p67 = por %p65, %p66
      %p68 = scmp.ne.s32.totalorder %s60, %s63
      %p69 = scmp.eq.s32.totalorder %s12, 0
      %p70 = por %p68, %p69
      %p71 = scmp.ne.s32.totalorder %s60, %s63
      %p72 = scmp.eq.s32.totalorder %s17, 1
      %p73 = por %p71, %p72
      %p74 = scmp.ne.s32.totalorder %s63, %s64
      %p75 = scmp.eq.s32.totalorder %s17, 0
      %p76 = por %p74, %p75
      %p77 = scmp.ne.s32.totalorder %s63, %s64
      %p78 = scmp.eq.s32.totalorder %s18, 1
      %p79 = por %p77, %p78
      %p81 = scmp.ne.s32.totalorder %s64, %s80
      %p82 = scmp.eq.s32.totalorder %s18, 0
      %p83 = por %p81, %p82
      %s84 = ssub.s32 %s19, %s31
      %p85 = scmp.eq.s32.totalorder %s84, 0
      %s87 = sadd.s32 %s86, 1
      %s88 = scalar_select %p85, %s86, %s87
      %p91 = pneg %p85
      %p92 = scmp.eq.s32.totalorder %s12, 1
      %p93 = por %p91, %p92
      %p94 = scmp.ne.s32.totalorder %s86, %s89
      %p95 = scmp.eq.s32.totalorder %s12, 0
      %p96 = por %p94, %p95
      %p97 = scmp.ne.s32.totalorder %s86, %s89
      %p98 = scmp.eq.s32.totalorder %s17, 1
      %p99 = por %p97, %p98
      %p100 = scmp.ne.s32.totalorder %s89, %s90
      %p101 = scmp.eq.s32.totalorder %s17, 0
      %p102 = por %p100, %p101
      %p103 = scmp.ne.s32.totalorder %s89, %s90
      %p104 = scmp.eq.s32.totalorder %s18, 1
      %p105 = por %p103, %p104
      %p107 = scmp.ne.s32.totalorder %s90, %s106
      %p108 = scmp.eq.s32.totalorder %s18, 0
      %p109 = por %p107, %p108
      %s110 = ssub.s32 %s19, %s31
      %s111 = ssub.s32 %s20, %s27
      %s112 = sor.u32 %s110, %s111
      %p113 = scmp.eq.s32.totalorder %s112, 0
      %s115 = sadd.s32 %s114, 1
      %s116 = scalar_select %p113, %s114, %s115
      %p119 = pneg %p113
      %p120 = scmp.eq.s32.totalorder %s12, 1
      %p121 = por %p119, %p120
      %p122 = scmp.ne.s32.totalorder %s114, %s117
      %p123 = scmp.eq.s32.totalorder %s12, 0
      %p124 = por %p122, %p123
      %p125 = scmp.ne.s32.totalorder %s114, %s117
      %p126 = scmp.eq.s32.totalorder %s17, 1
      %p127 = por %p125, %p126
      %p128 = scmp.ne.s32.totalorder %s117, %s118
      %p129 = scmp.eq.s32.totalorder %s17, 0
      %p130 = por %p128, %p129
      %p131 = scmp.ne.s32.totalorder %s117, %s118
      %p132 = scmp.eq.s32.totalorder %s18, 1
      %p133 = por %p131, %p132
      %p135 = scmp.ne.s32.totalorder %s118, %s134
      %p136 = scmp.eq.s32.totalorder %s18, 0
      %p137 = por %p135, %p136
      %p138 = scmp.le.s32.totalorder 1, %s12
      %p139 = scmp.lt.s32.totalorder %s12, 3
      %p140 = pnand %p138, %p139
      %p141 = pneg %p140
      // Predicated region
      $region9: #{tpu_custom_call.1} parent=5 // pred_check
        _
      $region10: #{tpu_custom_call.1} parent=5 // pred_check_branch
        %143 = sbr.rel (%p140) target = $region12
      $region11: #{tpu_custom_call.1} parent=5 // pred_region
        %s144 = ssub.s32 %s12, 1
        // Predicated region
        $region13: #{tpu_custom_call.1} parent=11 // pred_check
          %p145 = pneg %p50
        $region14: #{tpu_custom_call.1} parent=11 // pred_check_branch
          %147 = sbr.rel (%p145) target = $region16
        $region15: #{tpu_custom_call.1} parent=11 // pred_region
          %s148 = smul.u32 4, %s22
          %p149 = scmp.lt.s32.totalorder %s148, 3
          %s150 = scalar_select %p149, %s148, 3
          %s151 = smul.addr %s150, 8
          %s152 = scalar_lea.vmem %s0, %s151
          %s153 = smul.u32 4, %s22
        $region16: #{tpu_custom_call.1} parent=11 // pred_fallthru
          _
      $region12: #{tpu_custom_call.1} parent=5 // pred_fallthru
        _
      %p154 = scmp.lt.s32.totalorder %s12, 2
      // Predicated region
      $region17: #{tpu_custom_call.1} parent=5 // pred_check
        %p155 = pneg %p154
      $region18: #{tpu_custom_call.1} parent=5 // pred_check_branch
        %157 = sbr.rel (%p155) target = $region20
      $region19: #{tpu_custom_call.1} parent=5 // pred_region
        // Predicated region
        $region21: #{tpu_custom_call.1} parent=19 // pred_check
          %p158 = pneg %p70
        $region22: #{tpu_custom_call.1} parent=19 // pred_check_branch
          %160 = sbr.rel (%p158) target = $region24
        $region23: #{tpu_custom_call.1} parent=19 // pred_region
          %p161 = scmp.lt.s32.totalorder %s19, 1
          %s162 = scalar_select %p161, %s19, 1
          %s163 = smul.addr %s162, 2
          %s164 = smul.addr %s163, 8
          %s165 = scalar_lea.vmem %s1, %s164
        $region24: #{tpu_custom_call.1} parent=19 // pred_fallthru
          _
        // Predicated region
        $region25: #{tpu_custom_call.1} parent=19 // pred_check
          %p166 = pneg %p96
        $region26: #{tpu_custom_call.1} parent=19 // pred_check_branch
          %168 = sbr.rel (%p166) target = $region28
        $region27: #{tpu_custom_call.1} parent=19 // pred_region
          %p169 = scmp.lt.s32.totalorder %s19, 1
          %s170 = scalar_select %p169, %s19, 1
          %s171 = scalar_lea.vmem %s2, %s170
        $region28: #{tpu_custom_call.1} parent=19 // pred_fallthru
          _
      $region20: #{tpu_custom_call.1} parent=5 // pred_fallthru
        _
      %p172 = scmp.le.s32.totalorder 1, %s12
      %p173 = scmp.lt.s32.totalorder %s12, 3
      %p174 = pnand %p172, %p173
      %p175 = pneg %p174
      // Predicated region
      $region29: #{tpu_custom_call.1} parent=5 // pred_check
        _
      $region30: #{tpu_custom_call.1} parent=5 // pred_check_branch
        %177 = sbr.rel (%p174) target = $region32
      $region31: #{tpu_custom_call.1} parent=5 // pred_region
        %s178 = ssub.s32 %s12, 1
        %s179 = smul.u32 4, %s22
        %p180 = scmp.lt.s32.totalorder %s179, 3
        %s181 = scalar_select %p180, %s179, 3
        %s182 = smul.addr %s181, 8
        %s183 = scalar_lea.vmem %s0, %s182
        %p184 = pneg %p50
        %p185 = pneg %p47
        %p186 = scmp.lt.s32.totalorder %s21, 1
        %s187 = scalar_select %p186, %s21, 1
        %s188 = smul.addr %s187, 2
        %s189 = smul.addr %s188, 8
        %s190 = scalar_lea.vmem %s1, %s189
        %p191 = pneg %p76
        %p192 = pneg %p73
        %p193 = scmp.lt.s32.totalorder %s21, 1
        %s194 = scalar_select %p193, %s21, 1
        %s195 = scalar_lea.vmem %s2, %s194
        %p196 = pneg %p102
        %p197 = pneg %p99
        %p198 = pneg %p130
        %p199 = pneg %p127
        %s200 = sand.u32 %s117, 1
        %s201 = scalar_lea.sflag [#allocation3], %s200
        %s202 = sand.u32 %s117, 1
        %s203 = smul.addr %s202, 32
        %s204 = scalar_lea.vmem [#allocation2], %s203
        %s205 = smul.u32 4, %s22
        %p206 = scmp.lt.s32.totalorder %s205, 3
        %s207 = scalar_select %p206, %s205, 3
        %s208 = smul.addr %s207, 8
        %s209 = scalar_lea.vmem %s0, %s208
        %s210 = smul.u32 4, %s22
        %p211 = scmp.lt.s32.totalorder %s21, 1
        %s212 = scalar_select %p211, %s21, 1
        %s213 = smul.addr %s212, 2
        %s214 = smul.addr %s213, 8
        %s215 = scalar_lea.vmem %s1, %s214
        %p216 = scmp.lt.s32.totalorder %s21, 1
        %s217 = scalar_select %p216, %s21, 1
        %s218 = scalar_lea.vmem %s2, %s217
        %s219 = smul.u32 4, %s22
        %v220 = vld [vmem:[%s209] sm:$0xff]
        %v221 = vld [vmem:[%s209 + $0x8] sm:$0xff]
        %v222 = vld [vmem:[%s209 + $0x10] sm:$0xff]
        %v223 = vld [vmem:[%s209 + $0x18] sm:$0xff]
        %v224 = vld [vmem:[%s215] sm:$0xff]
        %v225 = vld [vmem:[%s215 + $0x8] sm:$0xff]
        %v226 = vld [vmem:[%s218] sm:$0x1]
        %v228 = vperm.slane %v226, 0
        %vm230 = vcmask 130048
        %v232 = vsel %vm230, %v220, 0
        %v235 = vsel %vm230, %v221, 0
        %v238 = vsel %vm230, %v222, 0
        %v241 = vsel %vm230, %v223, 0
        %243 = vmatpush.msra.mxu0 0.0
        %244 = vmatpush.msra.mxu0 0.0
        %245 = vmatpush.msra.mxu0 0.0
        %246 = vmatpush.msra.mxu0 0.0
        %247 = vmatpush.msra.mxu0 0.0
        %248 = vmatpush.msra.mxu0 0.0
        %249 = vmatpush.msra.mxu0 0.0
        %250 = vmatpush.msra.mxu0 0.0
        %251 = vmatpush.msra.mxu0 0.0
        %252 = vmatpush.msra.mxu0 0.0
        %253 = vmatpush.msra.mxu0 0.0
        %254 = vmatpush.msra.mxu0 0.0
        %255 = vmatpush.msra.mxu0 0.0
        %256 = vmatpush.msra.mxu0 0.0
        %257 = vmatpush.msra.mxu0 %v225
        %258 = vmatpush.msra.mxu0 %v224
        %259 = vmatmul.f32.gmra.mxu0 %v232
        %v260 = vpop.f32.mrf.mxu0
        %v261 = vadd.f32 %v228, %v260
        %262 = vmatmul.f32.gmra.mxu0 %v235
        %v263 = vpop.f32.mrf.mxu0
        %v264 = vadd.f32 %v228, %v263
        %265 = vmatmul.f32.gmra.mxu0 %v238
        %v266 = vpop.f32.mrf.mxu0
        %v267 = vadd.f32 %v228, %v266
        %268 = vmatmul.f32.gmra.mxu0 %v241
        %v269 = vpop.f32.mrf.mxu0
        %v270 = vadd.f32 %v228, %v269
        %271 = vdwg.mxu0
        %272 = vst [vmem:[%s204] sm:$0xff] %v261
        %273 = vst [vmem:[%s204 + $0x8] sm:$0xff] %v264
        %274 = vst [vmem:[%s204 + $0x10] sm:$0xff] %v267
        %275 = vst [vmem:[%s204 + $0x18] sm:$0xff] %v270
        %s276 = sand.u32 %s117, 1
        %s277 = scalar_lea.sflag [#allocation3], %s276
        %s278 = sand.u32 %s117, 1
        %s279 = smul.addr %s278, 32
        %s280 = scalar_lea.vmem [#allocation2], %s279
        // Predicated region
        $region33: #{tpu_custom_call.1} parent=31 // pred_check
          %p281 = pneg %p127
        $region34: #{tpu_custom_call.1} parent=31 // pred_check_branch
          %283 = sbr.rel (%p281) target = $region36
        $region35: #{tpu_custom_call.1} parent=31 // pred_region
          %s284 = smul.u32 4, %s22
          %286 = vsyncadd %s277, 0
          %s287 = smul.addr %s21, 4
          %s288 = sadd.s32 %s284, %s287
          %s289 = smul.addr %s288, 8
          %s290 = scalar_lea.hbm %s3, %s289
          %s291 = sshll.u32 %s280, 4
          %s292 = int_to_ptr.vmem [resolvable:$true] %s291
          %s293 = sshll.u32 %s290, 4
          %s294 = int_to_ptr.hbm [resolvable:$true] %s293
          %299 = dma.vmem_to_hbm [thread:$0]  %s292, 512, %s294, %s277, 128, 128, 8
        $region36: #{tpu_custom_call.1} parent=31 // pred_fallthru
          _
      $region32: #{tpu_custom_call.1} parent=5 // pred_fallthru
        _
      %p300 = scmp.le.s32.totalorder 2, %s12
      // Predicated region
      $region37: #{tpu_custom_call.1} parent=5 // pred_check
        %p301 = pneg %p300
      $region38: #{tpu_custom_call.1} parent=5 // pred_check_branch
        %303 = sbr.rel (%p301) target = $region40
      $region39: #{tpu_custom_call.1} parent=5 // pred_region
        %s304 = ssub.s32 %s12, 2
        // Predicated region
        $region41: #{tpu_custom_call.1} parent=39 // pred_check
          %p305 = pneg %p133
        $region42: #{tpu_custom_call.1} parent=39 // pred_check_branch
          %307 = sbr.rel (%p305) target = $region44
        $region43: #{tpu_custom_call.1} parent=39 // pred_region
          %s308 = sand.u32 %s118, 1
          %s309 = scalar_lea.sflag [#allocation3], %s308
          %s310 = sand.u32 %s118, 1
          %s311 = smul.addr %s310, 32
          %s312 = scalar_lea.vmem [#allocation2], %s311
          %314 = dma.done %s309, 512
        $region44: #{tpu_custom_call.1} parent=39 // pred_fallthru
          _
      $region40: #{tpu_custom_call.1} parent=5 // pred_fallthru
        _
    $region6: #{tpu_custom_call.1} parent=1 // loop_footer
      %s16 = sadd.s32 1, %s12
    $region7: #{tpu_custom_call.1} parent=1 // loop_footer_branch
      %11 = sbr.rel target = $region3
    $region8: #{tpu_custom_call.1} parent=1 // loop_exit
      _
    %315 = vsyncpa [#allocation3], 1
    %s316 = scalar_lea.sflag [#allocation3], 1
    %317 = vsyncpa %s316, 1

</llo_original>
